<compile_context>
chip_gen: v6e
topology: v6e:2x2x1
jax: 0.10.0
libtpu: 0.0.40
codegen_flags: <defaults>
</compile_context>

<pallas_src>
import functools

import jax
import jax.numpy as jnp
from jax.experimental import pallas as pl
from jax.experimental.pallas import tpu as pltpu


# ---------------------------------------------------------------------------
# Kernels
# ---------------------------------------------------------------------------

def _gln_resident_kernel(x_ref, w_ref, b_ref, o_ref, *, eps, inv_n):
    """Single-pass GLN: one whole (C, L) sample resident in VMEM.

    x_ref: (1, C, L) lane-dense block.  w_ref/b_ref: (1, C, 1) affine params.
    """
    x = x_ref[...].astype(jnp.float32)

    # Fused sum / sum-of-squares in one traversal (XLU reductions, VPU square).
    s = jnp.sum(x)
    ss = jnp.sum(x * x)
    mean = s * inv_n
    var = jnp.maximum(ss * inv_n - mean * mean, 0.0)   # clamp E[x^2]-mean^2 >= 0
    inv_std = jax.lax.rsqrt(var + eps)

    # Fold affine into per-channel scale/shift: out = x * a + bb.
    a = w_ref[...].astype(jnp.float32) * inv_std       # (1, C, 1)
    bb = b_ref[...].astype(jnp.float32) - mean * a     # (1, C, 1)
    o_ref[...] = (x * a + bb).astype(o_ref.dtype)


def _gln_stats_kernel(x_ref, sum_ref, sq_ref):
    """Tiled pass 1: accumulate per-lane sum / sumsq over the L tiles of a sample."""
    @pl.when(pl.program_id(1) == 0)
    def _():
        sum_ref[...] = jnp.zeros_like(sum_ref)
        sq_ref[...] = jnp.zeros_like(sq_ref)

    x = x_ref[...].astype(jnp.float32)                       # (1, C, TL)
    sum_ref[...] += jnp.sum(x, axis=1, keepdims=True)        # (1, 1, TL)
    sq_ref[...] += jnp.sum(x * x, axis=1, keepdims=True)     # (1, 1, TL)


def _gln_apply_kernel(x_ref, a_ref, b_ref, o_ref):
    """Tiled pass 2: out = x * a + bb with per-(sample, channel) scale/shift."""
    x = x_ref[...].astype(jnp.float32)
    o_ref[...] = (x * a_ref[...] + b_ref[...]).astype(o_ref.dtype)


# ---------------------------------------------------------------------------
# Wrappers
# ---------------------------------------------------------------------------

_RESIDENT_SLAB_LIMIT = 4 << 20   # max f32 bytes of one (C, L) sample slab for resident path
_TILE_BUDGET = 2 << 20           # target f32 bytes per (C, TL) tile in the tiled path


def _vmem_limit(nbytes):
    """Scoped VMEM cap: computed footprint * 1.5, clamped to [8 MiB, 48 MiB]."""
    return int(min(max(int(nbytes * 1.5), 8 << 20), 48 << 20))


def _pick_lane_tile(L, C):
    """Largest multiple of 128 dividing L whose f32 (C, TL) tile stays under budget."""
    if L % 128 != 0:
        return L
    best = 128
    t = 128
    while t <= L:
        if L % t == 0 and C * t * 4 <= _TILE_BUDGET:
            best = t
        t += 128
    return best


def _gln_resident(x3, w3, b3, *, eps, inv_n):
    N, C, L = x3.shape
    blk = C * L * x3.dtype.itemsize
    vmem = _vmem_limit(4 * blk + 2 * C * L * 4 + (1 << 20))
    kernel = functools.partial(_gln_resident_kernel, eps=eps, inv_n=inv_n)
    return pl.pallas_call(
        kernel,
        out_shape=jax.ShapeDtypeStruct((N, C, L), x3.dtype),
        grid_spec=pltpu.PrefetchScalarGridSpec(
            num_scalar_prefetch=0,
            grid=(N,),
            in_specs=[
                pl.BlockSpec((1, C, L), lambda n: (n, 0, 0)),
                pl.BlockSpec((1, C, 1), lambda n: (0, 0, 0)),
                pl.BlockSpec((1, C, 1), lambda n: (0, 0, 0)),
            ],
            out_specs=pl.BlockSpec((1, C, L), lambda n: (n, 0, 0)),
        ),
        compiler_params=pltpu.CompilerParams(
            dimension_semantics=("parallel",),
            vmem_limit_bytes=vmem,
        ),
    )(x3, w3, b3)


def _gln_tiled(x3, w3, b3, *, eps, inv_n, lane_tile=None):
    N, C, L = x3.shape
    TL = lane_tile if lane_tile is not None else _pick_lane_tile(L, C)
    assert L % TL == 0, "lane tile must divide the flattened spatial dim"
    T = L // TL
    tile = C * TL * x3.dtype.itemsize
    tile_f32 = C * TL * 4

    # Pass 1: per-sample lane-wide partial sum / sumsq, accumulated in a
    # VMEM-resident output block across the L-tile axis (pl.when init at t==0).
    stats_vmem = _vmem_limit(2 * tile + tile_f32 + 4 * TL * 4 + (1 << 20))
    part_sum, part_sq = pl.pallas_call(
        _gln_stats_kernel,
        out_shape=(jax.ShapeDtypeStruct((N, 1, TL), jnp.float32),
                   jax.ShapeDtypeStruct((N, 1, TL), jnp.float32)),
        grid_spec=pltpu.PrefetchScalarGridSpec(
            num_scalar_prefetch=0,
            grid=(N, T),
            in_specs=[pl.BlockSpec((1, C, TL), lambda n, t: (n, 0, t))],
            out_specs=(pl.BlockSpec((1, 1, TL), lambda n, t: (n, 0, 0)),
                       pl.BlockSpec((1, 1, TL), lambda n, t: (n, 0, 0))),
        ),
        compiler_params=pltpu.CompilerParams(
            dimension_semantics=("parallel", "arbitrary"),
            vmem_limit_bytes=stats_vmem,
        ),
    )(x3)

    # Tiny O(N*C) finalize as JAX glue: fold mean/inv_std/affine into per-sample,
    # per-channel scale & shift.
    s = jnp.sum(part_sum, axis=(1, 2))                       # (N,)
    ss = jnp.sum(part_sq, axis=(1, 2))                       # (N,)
    mean = s * inv_n
    var = jnp.maximum(ss * inv_n - mean * mean, 0.0)
    inv_std = jax.lax.rsqrt(var + eps)
    a = w3 * inv_std[:, None, None]                          # (N, C, 1)
    bb = b3 - mean[:, None, None] * a                        # (N, C, 1)

    # Pass 2: normalize sweep.  Both grid axes independent -> both v7x TCs busy.
    apply_vmem = _vmem_limit(4 * tile + 2 * tile_f32 + (1 << 20))
    return pl.pallas_call(
        _gln_apply_kernel,
        out_shape=jax.ShapeDtypeStruct((N, C, L), x3.dtype),
        grid_spec=pltpu.PrefetchScalarGridSpec(
            num_scalar_prefetch=0,
            grid=(N, T),
            in_specs=[
                pl.BlockSpec((1, C, TL), lambda n, t: (n, 0, t)),
                pl.BlockSpec((1, C, 1), lambda n, t: (n, 0, 0)),
                pl.BlockSpec((1, C, 1), lambda n, t: (n, 0, 0)),
            ],
            out_specs=pl.BlockSpec((1, C, TL), lambda n, t: (n, 0, t)),
        ),
        compiler_params=pltpu.CompilerParams(
            dimension_semantics=("parallel", "parallel"),
            vmem_limit_bytes=apply_vmem,
        ),
    )(x3, a, bb)


def global_layer_norm(x, weight=None, bias=None, *, eps=1e-8,
                      elementwise_affine=True, force_tiled=False, lane_tile=None):
    """GlobalLayerNorm forward.  x: (N, C, L) or (N, C, K, S); weight/bias: (C,1[,1])."""
    orig_shape = x.shape
    N, C = x.shape[0], x.shape[1]
    L = 1
    for d in x.shape[2:]:
        L *= d
    x3 = x.reshape(N, C, L)   # lane-dense: flattened spatial axis is the lane dim

    if elementwise_affine and weight is not None:
        w3 = weight.reshape(1, C, 1).astype(jnp.float32)
        b3 = bias.reshape(1, C, 1).astype(jnp.float32)
    else:
        w3 = jnp.ones((1, C, 1), jnp.float32)
        b3 = jnp.zeros((1, C, 1), jnp.float32)

    inv_n = 1.0 / float(C * L)
    slab_f32 = C * L * 4

    if not force_tiled and slab_f32 <= _RESIDENT_SLAB_LIMIT:
        out3 = _gln_resident(x3, w3, b3, eps=eps, inv_n=inv_n)
    else:
        out3 = _gln_tiled(x3, w3, b3, eps=eps, inv_n=inv_n, lane_tile=lane_tile)
    return out3.reshape(orig_shape)


def global_layer_norm_ref(x, weight, bias, *, eps=1e-8, elementwise_affine=True):
    """Pure-JAX reference mirroring the PyTorch forward (3D and 4D branches)."""
    axes = tuple(range(1, x.ndim))
    mean = jnp.mean(x, axis=axes, keepdims=True)
    var = jnp.mean((x - mean) ** 2, axis=axes, keepdims=True)
    xn = (x - mean) / jnp.sqrt(var + eps)
    if elementwise_affine:
        return weight[None] * xn + bias[None]
    return xn


if __name__ == "__main__":
    key = jax.random.PRNGKey(0)
    k1, k2 = jax.random.split(key)

    # 4D case: x of size [N, C, K, S], per-channel affine params (C, 1, 1).
    N, C, K, S = 2, 4, 16, 16
    x4 = jax.random.normal(k1, (N, C, K, S), dtype=jnp.float32)
    w4 = jnp.ones((C, 1, 1), dtype=jnp.float32)
    b4 = jnp.zeros((C, 1, 1), dtype=jnp.float32)
    ref4 = global_layer_norm_ref(x4, w4, b4, eps=1e-8)

    out4 = jax.block_until_ready(global_layer_norm(x4, w4, b4, eps=1e-8))
    assert out4.shape == (N, C, K, S)
    assert jnp.allclose(out4, ref4, atol=1e-5, rtol=1e-5), "resident path mismatch"

    # Exercise the tiled two-pass fallback (large samples / v7x VMEM budget),
    # forcing two 128-wide lane tiles so cross-tile accumulation is covered.
    out4t = jax.block_until_ready(
        global_layer_norm(x4, w4, b4, eps=1e-8, force_tiled=True, lane_tile=128))
    assert jnp.allclose(out4t, ref4, atol=1e-5, rtol=1e-5), "tiled path mismatch"

    # 3D case: x of size [N, C, L], per-channel affine params (C, 1).
    x3d = jax.random.normal(k2, (2, 4, 256), dtype=jnp.float32)
    w3d = jnp.ones((4, 1), dtype=jnp.float32)
    b3d = jnp.zeros((4, 1), dtype=jnp.float32)
    ref3 = global_layer_norm_ref(x3d, w3d, b3d, eps=1e-8)
    out3 = jax.block_until_ready(global_layer_norm(x3d, w3d, b3d, eps=1e-8))
    assert jnp.allclose(out3, ref3, atol=1e-5, rtol=1e-5), "3D case mismatch"

    print("KERNEL_OK")
</pallas_src>

<mosaic_0001>
module attributes {stable_mosaic.version = 11 : i64} {
  func.func @_gln_resident_kernel(%arg0: i32, %arg1: memref<1x4x256xf32, #tpu.memory_space<vmem>>, %arg2: memref<1x4x1xf32, #tpu.memory_space<vmem>>, %arg3: memref<1x4x1xf32, #tpu.memory_space<vmem>>, %arg4: memref<1x4x256xf32, #tpu.memory_space<vmem>>) attributes {dimension_semantics = [#tpu.dimension_semantics<parallel>], iteration_bounds = array<i64: 2>, scalar_prefetch = 0 : i64, scratch_operands = 0 : i64, tpu.core_type = #tpu.core_type<tc>, window_params = [{transform_indices = @transform_0, window_bounds = array<i64: 1, 4, 256>}, {pipeline_mode = #tpu.pipeline_mode<synchronous>, transform_indices = @transform_1, window_bounds = array<i64: 1, 4, 1>}, {pipeline_mode = #tpu.pipeline_mode<synchronous>, transform_indices = @transform_2, window_bounds = array<i64: 1, 4, 1>}, {transform_indices = @transform_3, window_bounds = array<i64: 1, 4, 256>}]} {
    %c0 = arith.constant 0 : index
    %c0_0 = arith.constant 0 : index
    %c0_1 = arith.constant 0 : index
    %0 = vector.load %arg1[%c0, %c0_0, %c0_1] : memref<1x4x256xf32, #tpu.memory_space<vmem>>, vector<1x4x256xf32>
    %1 = vector.shape_cast %0 : vector<1x4x256xf32> to vector<1x1x4x256xf32>
    %cst = arith.constant dense<0.000000e+00> : vector<1xf32>
    %2 = vector.multi_reduction <add>, %1, %cst [1, 2, 3] : vector<1x1x4x256xf32> to vector<1xf32>
    %3 = vector.shape_cast %2 : vector<1xf32> to vector<1x1x1x1xf32>
    %4 = vector.extract %3[0, 0, 0, 0] : f32 from vector<1x1x1x1xf32>
    %5 = arith.mulf %0, %0 : vector<1x4x256xf32>
    %6 = vector.shape_cast %5 : vector<1x4x256xf32> to vector<1x1x4x256xf32>
    %cst_2 = arith.constant dense<0.000000e+00> : vector<1xf32>
    %7 = vector.multi_reduction <add>, %6, %cst_2 [1, 2, 3] : vector<1x1x4x256xf32> to vector<1xf32>
    %8 = vector.shape_cast %7 : vector<1xf32> to vector<1x1x1x1xf32>
    %9 = vector.extract %8[0, 0, 0, 0] : f32 from vector<1x1x1x1xf32>
    %cst_3 = arith.constant 9.765625E-4 : f32
    %10 = arith.mulf %4, %cst_3 : f32
    %cst_4 = arith.constant 9.765625E-4 : f32
    %11 = arith.mulf %9, %cst_4 : f32
    %12 = arith.mulf %10, %10 : f32
    %13 = arith.subf %11, %12 : f32
    %cst_5 = arith.constant 0.000000e+00 : f32
    %14 = arith.maximumf %13, %cst_5 : f32
    %cst_6 = arith.constant 9.99999993E-9 : f32
    %15 = arith.addf %14, %cst_6 : f32
    %16 = math.rsqrt %15 : f32
    %c0_7 = arith.constant 0 : index
    %c0_8 = arith.constant 0 : index
    %c0_9 = arith.constant 0 : index
    %17 = vector.load %arg2[%c0_7, %c0_8, %c0_9] : memref<1x4x1xf32, #tpu.memory_space<vmem>>, vector<1x4x1xf32>
    %18 = vector.broadcast %16 : f32 to vector<1x4x1xf32>
    %19 = arith.mulf %17, %18 : vector<1x4x1xf32>
    %c0_10 = arith.constant 0 : index
    %c0_11 = arith.constant 0 : index
    %c0_12 = arith.constant 0 : index
    %20 = vector.load %arg3[%c0_10, %c0_11, %c0_12] : memref<1x4x1xf32, #tpu.memory_space<vmem>>, vector<1x4x1xf32>
    %21 = vector.broadcast %10 : f32 to vector<1x4x1xf32>
    %22 = arith.mulf %21, %19 : vector<1x4x1xf32>
    %23 = arith.subf %20, %22 : vector<1x4x1xf32>
    %24 = vector.broadcast %19 : vector<1x4x1xf32> to vector<1x4x256xf32>
    %25 = arith.mulf %0, %24 : vector<1x4x256xf32>
    %26 = vector.broadcast %23 : vector<1x4x1xf32> to vector<1x4x256xf32>
    %27 = arith.addf %25, %26 : vector<1x4x256xf32>
    %c0_13 = arith.constant 0 : index
    %c0_14 = arith.constant 0 : index
    %c0_15 = arith.constant 0 : index
    %28 = vector.load %arg4[%c0_13, %c0_14, %c0_15] : memref<1x4x256xf32, #tpu.memory_space<vmem>>, vector<1x4x256xf32>
    tpu.vector_store %arg4[%c0_13, %c0_14, %c0_15], %27 {strides = array<i32>} : memref<1x4x256xf32, #tpu.memory_space<vmem>>, vector<1x4x256xf32>,
    return
  }
  func.func @transform_0(%arg0: i32) -> (i32, i32, i32) {
    %c0_i32 = arith.constant 0 : i32
    %c0_i32_0 = arith.constant 0 : i32
    %c0_i32_1 = arith.constant 0 : i32
    return %arg0, %c0_i32, %c0_i32_0 : i32, i32, i32
  }
  func.func @transform_1(%arg0: i32) -> (i32, i32, i32) {
    %c0_i32 = arith.constant 0 : i32
    %c0_i32_0 = arith.constant 0 : i32
    %c0_i32_1 = arith.constant 0 : i32
    %c0_i32_2 = arith.constant 0 : i32
    return %c0_i32, %c0_i32_0, %c0_i32_1 : i32, i32, i32
  }
  func.func @transform_2(%arg0: i32) -> (i32, i32, i32) {
    %c0_i32 = arith.constant 0 : i32
    %c0_i32_0 = arith.constant 0 : i32
    %c0_i32_1 = arith.constant 0 : i32
    %c0_i32_2 = arith.constant 0 : i32
    return %c0_i32, %c0_i32_0, %c0_i32_1 : i32, i32, i32
  }
  func.func @transform_3(%arg0: i32) -> (i32, i32, i32) {
    %c0_i32 = arith.constant 0 : i32
    %c0_i32_0 = arith.constant 0 : i32
    %c0_i32_1 = arith.constant 0 : i32
    return %arg0, %c0_i32, %c0_i32_0 : i32, i32, i32
  }
}

</mosaic_0001>

<llo_original>
// kernel: tpu_custom_call.1
$region0: #{tpu_custom_call.1}
  #allocation0 [shape = 'u32[]', space=smem, size = 0x4, offset = 0x4, fixed_abs, tag = 'smem constant byte address 0x4 - core index']
  #allocation1 [shape = 'u32[144,128]{1,0:T(1,128)}', space=vmem, size = 0x12000, scoped, tag = 'internal scratch']
  %s0 = inlined_call_operand.hbm [shape: f32[2,4,256], index: 0, kind: input, shape index: {}]
  %s1 = inlined_call_operand.vmem [shape: f32[1,4,1], index: 1, kind: input, shape index: {}]
  %s2 = inlined_call_operand.vmem [shape: f32[1,4,1], index: 2, kind: input, shape index: {}]
  %s3 = inlined_call_operand.hbm [shape: f32[2,4,256], index: 3, kind: output, shape index: {}]
  %s4 = sld [smem:[#allocation0]]
  $region49: #{tpu_custom_call.1} parent=0
    _
  %s6 = ssub.s32 1, %s4
  %s7 = scalar_select 0, %s6, %s4
  $region1: #{tpu_custom_call.1} parent=0
    #allocation2 [shape = 'u8[8192]{0}', space=vmem, size = 0x2000, scoped, tag = 'input window, operand 0']
    #allocation3 [shape = 's32[2]{0}', space=sflag, size = 0x8, scoped, tag = 'scoped memory for tpu_custom_call.1']
    #allocation4 [shape = 's32[2]{0}', space=sflag, size = 0x8, scoped, tag = 'scoped memory for tpu_custom_call.1']
    #allocation5 [shape = 'u8[8192]{0}', space=vmem, size = 0x2000, scoped, tag = 'output window, operand 0']
    %8 = vsyncpa [#allocation3], 0
    %s9 = scalar_lea.sflag [#allocation3], 1
    %10 = vsyncpa %s9, 0
    %11 = vsyncpa [#allocation4], 0
    %s12 = scalar_lea.sflag [#allocation4], 1
    %13 = vsyncpa %s12, 0
    loop: start=0, step=1, limit=4
    $region2: #{tpu_custom_call.1} parent=1 // loop_pre_header
      _
    $region3: #{tpu_custom_call.1} parent=1 // loop_header
      %s15 = sphi 0, %s19
      %p16 = scmp.ge.s32.totalorder %s15, 4
      %s25 = sphi 0, %s27
      %s28 = sphi 0, %s25
      %s29 = sphi 0, %s28
      %s45 = sphi 0, %s29
      %s49 = sphi 0, %s49
      %s51 = sphi 0, %s49
      %s52 = sphi 0, %s51
      %s66 = sphi 0, %s52
      %s70 = sphi 0, %s70
      %s72 = sphi 0, %s70
      %s73 = sphi 0, %s72
      %s87 = sphi 0, %s73
      %s93 = sphi 0, %s95
      %s96 = sphi 0, %s93
      %s97 = sphi 0, %s96
      %s113 = sphi 0, %s97
    $region4: #{tpu_custom_call.1} parent=1 // loop_header_branch
      %18 = sbr.rel (%p16) target = $region8
    $region5: #{tpu_custom_call.1} parent=1 // loop_body
      %s20 = ssub.s32 %s15, 1
      %s21 = ssub.s32 %s15, 2
      %s22 = sadd.s32 %s15, 1
      %s23 = ssub.s32 %s15, %s22
      %p24 = scmp.eq.s32.totalorder %s23, 0
      %s26 = sadd.s32 %s25, 1
      %s27 = scalar_select %p24, %s25, %s26
      %p30 = pneg %p24
      %p31 = scmp.eq.s32.totalorder %s15, 1
      %p32 = por %p30, %p31
      %p33 = scmp.ne.s32.totalorder %s25, %s28
      %p34 = scmp.eq.s32.totalorder %s15, 0
      %p35 = por %p33, %p34
      %p36 = scmp.ne.s32.totalorder %s25, %s28
      %p37 = scmp.eq.s32.totalorder %s20, 1
      %p38 = por %p36, %p37
      %p39 = scmp.ne.s32.totalorder %s28, %s29
      %p40 = scmp.eq.s32.totalorder %s20, 0
      %p41 = por %p39, %p40
      %p42 = scmp.ne.s32.totalorder %s28, %s29
      %p43 = scmp.eq.s32.totalorder %s21, 1
      %p44 = por %p42, %p43
      %p46 = scmp.ne.s32.totalorder %s29, %s45
      %p47 = scmp.eq.s32.totalorder %s21, 0
      %p48 = por %p46, %p47
      %s50 = sadd.s32 %s49, 1
      %p53 = scmp.eq.s32.totalorder %s15, 1
      %p54 = scmp.ne.s32.totalorder %s49, %s51
      %p55 = scmp.eq.s32.totalorder %s15, 0
      %p56 = por %p54, %p55
      %p57 = scmp.ne.s32.totalorder %s49, %s51
      %p58 = scmp.eq.s32.totalorder %s20, 1
      %p59 = por %p57, %p58
      %p60 = scmp.ne.s32.totalorder %s51, %s52
      %p61 = scmp.eq.s32.totalorder %s20, 0
      %p62 = por %p60, %p61
      %p63 = scmp.ne.s32.totalorder %s51, %s52
      %p64 = scmp.eq.s32.totalorder %s21, 1
      %p65 = por %p63, %p64
      %p67 = scmp.ne.s32.totalorder %s52, %s66
      %p68 = scmp.eq.s32.totalorder %s21, 0
      %p69 = por %p67, %p68
      %s71 = sadd.s32 %s70, 1
      %p74 = scmp.eq.s32.totalorder %s15, 1
      %p75 = scmp.ne.s32.totalorder %s70, %s72
      %p76 = scmp.eq.s32.totalorder %s15, 0
      %p77 = por %p75, %p76
      %p78 = scmp.ne.s32.totalorder %s70, %s72
      %p79 = scmp.eq.s32.totalorder %s20, 1
      %p80 = por %p78, %p79
      %p81 = scmp.ne.s32.totalorder %s72, %s73
      %p82 = scmp.eq.s32.totalorder %s20, 0
      %p83 = por %p81, %p82
      %p84 = scmp.ne.s32.totalorder %s72, %s73
      %p85 = scmp.eq.s32.totalorder %s21, 1
      %p86 = por %p84, %p85
      %p88 = scmp.ne.s32.totalorder %s73, %s87
      %p89 = scmp.eq.s32.totalorder %s21, 0
      %p90 = por %p88, %p89
      %s91 = ssub.s32 %s15, %s22
      %p92 = scmp.eq.s32.totalorder %s91, 0
      %s94 = sadd.s32 %s93, 1
      %s95 = scalar_select %p92, %s93, %s94
      %p98 = pneg %p92
      %p99 = scmp.eq.s32.totalorder %s15, 1
      %p100 = por %p98, %p99
      %p101 = scmp.ne.s32.totalorder %s93, %s96
      %p102 = scmp.eq.s32.totalorder %s15, 0
      %p103 = por %p101, %p102
      %p104 = scmp.ne.s32.totalorder %s93, %s96
      %p105 = scmp.eq.s32.totalorder %s20, 1
      %p106 = por %p104, %p105
      %p107 = scmp.ne.s32.totalorder %s96, %s97
      %p108 = scmp.eq.s32.totalorder %s20, 0
      %p109 = por %p107, %p108
      %p110 = scmp.ne.s32.totalorder %s96, %s97
      %p111 = scmp.eq.s32.totalorder %s21, 1
      %p112 = por %p110, %p111
      %p114 = scmp.ne.s32.totalorder %s97, %s113
      %p115 = scmp.eq.s32.totalorder %s21, 0
      %p116 = por %p114, %p115
      %p117 = scmp.le.s32.totalorder 1, %s15
      %p118 = scmp.lt.s32.totalorder %s15, 3
      %p119 = pnand %p117, %p118
      %p120 = pneg %p119
      // Predicated region
      $region9: #{tpu_custom_call.1} parent=5 // pred_check
        _
      $region10: #{tpu_custom_call.1} parent=5 // pred_check_branch
        %122 = sbr.rel (%p119) target = $region12
      $region11: #{tpu_custom_call.1} parent=5 // pred_region
        %s123 = ssub.s32 %s15, 1
        // Predicated region
        $region13: #{tpu_custom_call.1} parent=11 // pred_check
          %p124 = pneg %p62
        $region14: #{tpu_custom_call.1} parent=11 // pred_check_branch
          %126 = sbr.rel (%p124) target = $region16
        $region15: #{tpu_custom_call.1} parent=11 // pred_region
          _
        $region16: #{tpu_custom_call.1} parent=11 // pred_fallthru
          _
        // Predicated region
        $region17: #{tpu_custom_call.1} parent=11 // pred_check
          %p127 = pneg %p83
        $region18: #{tpu_custom_call.1} parent=11 // pred_check_branch
          %129 = sbr.rel (%p127) target = $region20
        $region19: #{tpu_custom_call.1} parent=11 // pred_region
          _
        $region20: #{tpu_custom_call.1} parent=11 // pred_fallthru
          _
      $region12: #{tpu_custom_call.1} parent=5 // pred_fallthru
        _
      %p130 = scmp.lt.s32.totalorder %s15, 2
      // Predicated region
      $region21: #{tpu_custom_call.1} parent=5 // pred_check
        %p131 = pneg %p130
      $region22: #{tpu_custom_call.1} parent=5 // pred_check_branch
        %133 = sbr.rel (%p131) target = $region24
      $region23: #{tpu_custom_call.1} parent=5 // pred_region
        // Predicated region
        $region25: #{tpu_custom_call.1} parent=23 // pred_check
          %p134 = pneg %p35
        $region26: #{tpu_custom_call.1} parent=23 // pred_check_branch
          %136 = sbr.rel (%p134) target = $region28
        $region27: #{tpu_custom_call.1} parent=23 // pred_region
          %s137 = sand.u32 %s25, 1
          %s138 = scalar_lea.sflag [#allocation3], %s137
          %s139 = sand.u32 %s25, 1
          %s140 = smul.addr %s139, 8
          %s141 = scalar_lea.vmem [#allocation2], %s140
          %s143 = ssub.s32 128, 128
          %144 = vsyncadd %s138, %s143
          %s145 = smul.addr %s15, 2
          %s146 = smul.addr %s145, 64
          %s147 = scalar_lea.hbm %s0, %s146
          %s149 = sshll.u32 %s141, 4
          %s150 = int_to_ptr.vmem [resolvable:$true] %s149
          %152 = dma.hbm_to_vmem [thread:$0]  %s147, 128, %s150, %s138
        $region28: #{tpu_custom_call.1} parent=23 // pred_fallthru
          _
      $region24: #{tpu_custom_call.1} parent=5 // pred_fallthru
        _
      %p153 = scmp.le.s32.totalorder 1, %s15
      %p154 = scmp.lt.s32.totalorder %s15, 3
      %p155 = pnand %p153, %p154
      %p156 = pneg %p155
      // Predicated region
      $region29: #{tpu_custom_call.1} parent=5 // pred_check
        _
      $region30: #{tpu_custom_call.1} parent=5 // pred_check_branch
        %158 = sbr.rel (%p155) target = $region32
      $region31: #{tpu_custom_call.1} parent=5 // pred_region
        %s159 = ssub.s32 %s15, 1
        %s160 = sand.u32 %s28, 1
        %s161 = scalar_lea.sflag [#allocation3], %s160
        %s162 = sand.u32 %s28, 1
        %s163 = smul.addr %s162, 8
        %s164 = scalar_lea.vmem [#allocation2], %s163
        // Predicated region
        $region33: #{tpu_custom_call.1} parent=31 // pred_check
          %p165 = pneg %p41
        $region34: #{tpu_custom_call.1} parent=31 // pred_check_branch
          %167 = sbr.rel (%p165) target = $region36
        $region35: #{tpu_custom_call.1} parent=31 // pred_region
          %168 = dma.done %s161, 128
        $region36: #{tpu_custom_call.1} parent=31 // pred_fallthru
          _
        %s169 = sand.u32 %s28, 1
        %s170 = scalar_lea.sflag [#allocation3], %s169
        %s171 = sand.u32 %s28, 1
        %s172 = smul.addr %s171, 8
        %s173 = scalar_lea.vmem [#allocation2], %s172
        %p174 = pneg %p41
        %p175 = pneg %p38
        %p176 = pneg %p62
        %p177 = pneg %p59
        %p178 = pneg %p83
        %p179 = pneg %p80
        %p180 = pneg %p109
        %p181 = pneg %p106
        %s182 = sand.u32 %s96, 1
        %s183 = scalar_lea.sflag [#allocation4], %s182
        %s184 = sand.u32 %s96, 1
        %s185 = smul.addr %s184, 8
        %s186 = scalar_lea.vmem [#allocation5], %s185
        %v187 = vld [vmem:[%s164] sm:$0xff]
        %v189 = vcombine.high %v187, %v187
        %vm191 = vcmask 1043456
        %v192 = vsel %vm191, %v187, 0.0
        %v193 = vsel %vm191, %v189, 0.0
        %v194 = vadd.f32 %v192, %v193
        %195 = vadd.xlane.f32.xlu0 %v194
        %v196 = vpop.xlane.xlu0 %195
        %v197 = vrot.slane %v196, 4
        %v198 = vadd.f32 %v196, %v197
        %v199 = vrot.slane %v198, 2
        %v200 = vadd.f32 %v198, %v199
        %v201 = vrot.slane %v200, 1
        %v202 = vadd.f32 %v200, %v201
        %s203 = vtos %v202
        %v204 = vmul.f32 %v187, %v187
        %v206 = vcombine.high %v204, %v204
        %v208 = vsel %vm191, %v204, 0.0
        %v209 = vsel %vm191, %v206, 0.0
        %v210 = vadd.f32 %v208, %v209
        %211 = vadd.xlane.f32.xlu0 %v210
        %v212 = vpop.xlane.xlu0 %211
        %v213 = vrot.slane %v212, 4
        %v214 = vadd.f32 %v212, %v213
        %v215 = vrot.slane %v214, 2
        %v216 = vadd.f32 %v214, %v215
        %v217 = vrot.slane %v216, 1
        %v218 = vadd.f32 %v216, %v217
        %s219 = vtos %v218
        %s220 = smul.f32 %s203, 0.0009765625
        %s221 = smul.f32 %s219, 0.0009765625
        %s222 = smul.f32 %s220, %s220
        %s223 = ssub.f32 %s221, %s222
        %s224 = smax.f32 %s223, 0.0
        %s225 = sadd.f32 %s224, 1e-08
        %v226 = vstv %s225
        %v227 = vrsqrt.pop %v226
        %s228 = vtos %v227
        %v229 = vld [vmem:[%s1] sm:$0xf]
        %v230 = vstv %s228
        %v231 = vmul.f32 %v229, %v230
        %v232 = vld [vmem:[%s2] sm:$0xf]
        %v233 = vstv %s220
        %v234 = vmul.f32 %v233, %v231
        %v235 = vsub.f32 %v232, %v234
        %237 = vset.pattern.permute.xlu0 0
        %238 = vperm.xlu0 %237, %v231
        %v239 = vpop.permute.xlu0 %238
        %v241 = vunpack.c.l.s4 839922192
        %v242 = vunpack.c.0.s8 %v241
        %v243 = vlaneseq
        %v244 = vshrl.u32 %v243, 7
        %v245 = vsub.s32 %v242, %v244
        %v246 = vrot.slane %v239, %v245
        %v248 = vmul.f32 %v187, %v246
        %250 = vset.pattern.permute.xlu0 0
        %251 = vperm.xlu0 %250, %v235
        %v252 = vpop.permute.xlu0 %251
        %v254 = vunpack.c.l.s4 839922192
        %v255 = vunpack.c.0.s8 %v254
        %v256 = vlaneseq
        %v257 = vshrl.u32 %v256, 7
        %v258 = vsub.s32 %v255, %v257
        %v259 = vrot.slane %v252, %v258
        %v261 = vadd.f32 %v248, %v259
        %262 = vst [vmem:[%s186] sm:$0xff] %v261
        %s263 = sand.u32 %s96, 1
        %s264 = scalar_lea.sflag [#allocation4], %s263
        %s265 = sand.u32 %s96, 1
        %s266 = smul.addr %s265, 8
        %s267 = scalar_lea.vmem [#allocation5], %s266
        // Predicated region
        $region37: #{tpu_custom_call.1} parent=31 // pred_check
          %p268 = pneg %p106
        $region38: #{tpu_custom_call.1} parent=31 // pred_check_branch
          %270 = sbr.rel (%p268) target = $region40
        $region39: #{tpu_custom_call.1} parent=31 // pred_region
          %s272 = ssub.s32 128, 128
          %273 = vsyncadd %s264, %s272
          %s274 = smul.addr %s20, 2
          %s275 = smul.addr %s274, 64
          %s276 = scalar_lea.hbm %s3, %s275
          %s278 = sshll.u32 %s267, 4
          %s279 = int_to_ptr.vmem [resolvable:$true] %s278
          %281 = dma.vmem_to_hbm [thread:$0]  %s279, 128, %s276, %s264
        $region40: #{tpu_custom_call.1} parent=31 // pred_fallthru
          _
      $region32: #{tpu_custom_call.1} parent=5 // pred_fallthru
        _
      %p282 = scmp.le.s32.totalorder 2, %s15
      // Predicated region
      $region41: #{tpu_custom_call.1} parent=5 // pred_check
        %p283 = pneg %p282
      $region42: #{tpu_custom_call.1} parent=5 // pred_check_branch
        %285 = sbr.rel (%p283) target = $region44
      $region43: #{tpu_custom_call.1} parent=5 // pred_region
        %s286 = ssub.s32 %s15, 2
        // Predicated region
        $region45: #{tpu_custom_call.1} parent=43 // pred_check
          %p287 = pneg %p112
        $region46: #{tpu_custom_call.1} parent=43 // pred_check_branch
          %289 = sbr.rel (%p287) target = $region48
        $region47: #{tpu_custom_call.1} parent=43 // pred_region
          %s290 = sand.u32 %s97, 1
          %s291 = scalar_lea.sflag [#allocation4], %s290
          %s292 = sand.u32 %s97, 1
          %s293 = smul.addr %s292, 8
          %s294 = scalar_lea.vmem [#allocation5], %s293
          %295 = dma.done %s291, 128
        $region48: #{tpu_custom_call.1} parent=43 // pred_fallthru
          _
      $region44: #{tpu_custom_call.1} parent=5 // pred_fallthru
        _
    $region6: #{tpu_custom_call.1} parent=1 // loop_footer
      %s19 = sadd.s32 1, %s15
    $region7: #{tpu_custom_call.1} parent=1 // loop_footer_branch
      %14 = sbr.rel target = $region3
    $region8: #{tpu_custom_call.1} parent=1 // loop_exit
      _
    %296 = vsyncpa [#allocation3], 1
    %s297 = scalar_lea.sflag [#allocation3], 1
    %298 = vsyncpa %s297, 1
    %299 = vsyncpa [#allocation4], 1
    %s300 = scalar_lea.sflag [#allocation4], 1
    %301 = vsyncpa %s300, 1

</llo_original>
